<compile_context>
chip_gen: v5e
topology: v5e:2x2
jax: 0.10.0
libtpu: 0.0.40
codegen_flags: <defaults>
</compile_context>

<pallas_src>
import functools

import numpy as np
import jax
import jax.numpy as jnp
from jax.experimental import pallas as pl
from jax.experimental.pallas import tpu as pltpu


def _interp_subsample_matrix(out_full: int, stride: int) -> np.ndarray:
    """(out_full, out_full) matrix = bilinear_upsample(scale=stride) @ subsample(stride).

    Matches F.conv2d(stride=s, padding=1) followed by
    F.interpolate(scale_factor=s, mode='bilinear', align_corners=False), applied
    separably (per axis) to the stride-1 conv output.
    """
    in_sub = (out_full - 1) // stride + 1
    assert in_sub * stride == out_full, "spatial size must survive the down/up round trip"
    U = np.zeros((out_full, in_sub), np.float32)
    inv = 1.0 / float(stride)
    for o in range(out_full):
        src = (o + 0.5) * inv - 0.5
        if src < 0.0:
            src = 0.0
        x0 = min(int(np.floor(src)), in_sub - 1)
        x1 = min(x0 + 1, in_sub - 1)
        lam = src - x0
        U[o, x0] += 1.0 - lam
        U[o, x1] += lam
    S = np.zeros((in_sub, out_full), np.float32)
    for i in range(in_sub):
        S[i, i * stride] = 1.0
    return (U @ S).astype(np.float32)


def _edge_loss_kernel(x_ref, t_ref, lhs_hbm, rhs_hbm, out_ref,
                      lhs_vmem, rhs_vmem, pos_acc, neg_acc, sp_acc, sn_acc, dma_sem,
                      *, H, W, ignore_value, scale):
    b = pl.program_id(0)

    @pl.when(b == 0)
    def _init():
        # Single-buffered constants: one DMA each into persistent VMEM scratch.
        cp_l = pltpu.make_async_copy(lhs_hbm, lhs_vmem, dma_sem.at[0])
        cp_r = pltpu.make_async_copy(rhs_hbm, rhs_vmem, dma_sem.at[1])
        cp_l.start()
        cp_r.start()
        cp_l.wait()
        cp_r.wait()
        pos_acc[...] = jnp.zeros_like(pos_acc)
        neg_acc[...] = jnp.zeros_like(neg_acc)
        sp_acc[...] = jnp.zeros_like(sp_acc)
        sn_acc[...] = jnp.zeros_like(sn_acc)

    t = t_ref[0]   # (H, W) raw target labels (float-cast)
    x = x_ref[0]   # (H, W) edge logits

    # --- 3x3 Laplacian, stride 1, zero padding 1:  y1 = 9*t - boxsum3x3(t), separable ---
    zrow = jnp.zeros((1, W), jnp.float32)
    zcol = jnp.zeros((H, 1), jnp.float32)
    vsum = (t
            + jnp.concatenate([zrow, t[:H - 1, :]], axis=0)     # t[i-1, j]
            + jnp.concatenate([t[1:, :], zrow], axis=0))        # t[i+1, j]
    box = (vsum
           + jnp.concatenate([zcol, vsum[:, :W - 1]], axis=1)   # v[i, j-1]
           + jnp.concatenate([vsum[:, 1:], zcol], axis=1))      # v[i, j+1]
    y1 = 9.0 * t - box

    # --- stride-2 / stride-4 conv + bilinear upsample, as MXU matmuls ---
    # lhs_vmem = [M2h; M4h]  (2H, H),   rhs_vmem = [M2w^T | M4w^T]  (W, 2W).
    # NOTE: default MXU precision is exact here for realistic label ranges because y1 is
    # integer-valued and the interp weights are dyadic (k/8); the !=0 test below is the
    # only consumer of these values.
    z = jnp.dot(lhs_vmem[...], y1, preferred_element_type=jnp.float32)           # (2H, W)
    y2u = jnp.dot(z[:H, :], rhs_vmem[:, :W], preferred_element_type=jnp.float32)  # (H, W)
    y3u = jnp.dot(z[H:, :], rhs_vmem[:, W:], preferred_element_type=jnp.float32)  # (H, W)

    # --- fused binarize + ignore handling (boolean masks, no float edge plane) ---
    edge = (y1 != 0.0) | (y2u != 0.0) | (y3u != 0.0)
    valid = t != ignore_value
    pos = (edge & valid).astype(jnp.float32)
    neg = ((~edge) & valid).astype(jnp.float32)

    # stable BCE-with-logits: target 0 -> bce0, target 1 -> bce0 - x.
    bce0 = jnp.maximum(x, 0.0) + jnp.log(1.0 + jnp.exp(-jnp.abs(x)))

    # sublane-only per-step accumulation into (1, W) vector accumulators.
    pos_acc[...] += jnp.sum(pos, axis=0, keepdims=True)
    neg_acc[...] += jnp.sum(neg, axis=0, keepdims=True)
    sp_acc[...] += jnp.sum(pos * (bce0 - x), axis=0, keepdims=True)
    sn_acc[...] += jnp.sum(neg * bce0, axis=0, keepdims=True)

    @pl.when(b == pl.num_programs(0) - 1)
    def _finalize():
        pn = jnp.sum(pos_acc[...], keepdims=True)   # (1, 1) pos count over whole batch
        nn = jnp.sum(neg_acc[...], keepdims=True)
        sp = jnp.sum(sp_acc[...], keepdims=True)
        sn = jnp.sum(sn_acc[...], keepdims=True)
        sm = pn + nn
        # weight[pos] = neg_num/sum, weight[neg] = pos_num/sum, weight[ignore] = 0
        out_ref[...] = ((nn / sm) * sp + (pn / sm) * sn) * scale


def edge_seg_light_loss(inputs, targets, ignore_index=255, loss_weight=1.0):
    """JAX/Pallas equivalent of EdgeSegLightLoss.forward (edge_method='laplacian', dice=False).

    inputs : (B, 1, H, W) float edge logits
    targets: (B, 1, H, W) integer labels (ignore_index marks ignored pixels)
    """
    B, C, H, W = inputs.shape
    assert C == 1
    x = inputs.reshape(B, H, W).astype(jnp.float32)
    t = targets.reshape(B, H, W).astype(jnp.float32)

    m2h = _interp_subsample_matrix(H, 2)
    m4h = _interp_subsample_matrix(H, 4)
    m2w = _interp_subsample_matrix(W, 2)
    m4w = _interp_subsample_matrix(W, 4)
    lhs = jnp.asarray(np.concatenate([m2h, m4h], axis=0))        # (2H, H)
    rhs = jnp.asarray(np.concatenate([m2w.T, m4w.T], axis=1))    # (W, 2W)

    kernel = functools.partial(
        _edge_loss_kernel, H=H, W=W,
        ignore_value=float(ignore_index),
        scale=float(loss_weight) / float(B * H * W))   # BCE reduction='mean' over all pixels

    out = pl.pallas_call(
        kernel,
        out_shape=jax.ShapeDtypeStruct((1, 1), jnp.float32),
        grid_spec=pltpu.PrefetchScalarGridSpec(
            num_scalar_prefetch=0,
            grid=(B,),
            in_specs=[
                pl.BlockSpec((1, H, W), lambda b: (b, 0, 0)),    # logits
                pl.BlockSpec((1, H, W), lambda b: (b, 0, 0)),    # targets
                pl.BlockSpec(memory_space=pl.ANY),               # stacked left operator (HBM)
                pl.BlockSpec(memory_space=pl.ANY),               # stacked right operator (HBM)
            ],
            out_specs=pl.BlockSpec((1, 1), lambda b: (0, 0)),
            scratch_shapes=[
                pltpu.VMEM((2 * H, H), jnp.float32),             # single-buffered left operator
                pltpu.VMEM((W, 2 * W), jnp.float32),             # single-buffered right operator
                pltpu.VMEM((1, W), jnp.float32),                 # pos count rows
                pltpu.VMEM((1, W), jnp.float32),                 # neg count rows
                pltpu.VMEM((1, W), jnp.float32),                 # pos BCE sum rows
                pltpu.VMEM((1, W), jnp.float32),                 # neg BCE sum rows
                pltpu.SemaphoreType.DMA((2,)),
            ]),
        compiler_params=pltpu.CompilerParams(
            dimension_semantics=("arbitrary",),   # serial: cross-step accumulators + one-shot constant load
            vmem_limit_bytes=64 * 1024 * 1024),
    )(x, t, lhs, rhs)
    return out[0, 0]


if __name__ == "__main__":
    key = jax.random.PRNGKey(0)
    k1, k2, k3 = jax.random.split(key, 3)
    B, H, W = 2, 16, 16
    inputs = jax.random.normal(k1, (B, 1, H, W), dtype=jnp.float32)          # edge logits
    targets = jax.random.randint(k2, (B, 1, H, W), 0, 5, dtype=jnp.int32)    # seg labels
    ignore_mask = jax.random.uniform(k3, (B, 1, H, W)) < 0.05
    targets = jnp.where(ignore_mask, 255, targets)                           # sprinkle ignore pixels

    loss = edge_seg_light_loss(inputs, targets, ignore_index=255, loss_weight=1.0)
    loss = jax.block_until_ready(loss)
    assert jnp.isfinite(loss), f"loss is not finite: {loss}"
    print("KERNEL_OK")
</pallas_src>

<mosaic_0001>
module attributes {stable_mosaic.version = 11 : i64} {
  func.func @_edge_loss_kernel(%arg0: i32, %arg1: memref<1x16x16xf32, #tpu.memory_space<vmem>>, %arg2: memref<1x16x16xf32, #tpu.memory_space<vmem>>, %arg3: memref<32x16xf32, #tpu.memory_space<any>>, %arg4: memref<16x32xf32, #tpu.memory_space<any>>, %arg5: memref<1x1xf32, #tpu.memory_space<vmem>>, %arg6: memref<32x16xf32, #tpu.memory_space<vmem>>, %arg7: memref<16x32xf32, #tpu.memory_space<vmem>>, %arg8: memref<1x16xf32, #tpu.memory_space<vmem>>, %arg9: memref<1x16xf32, #tpu.memory_space<vmem>>, %arg10: memref<1x16xf32, #tpu.memory_space<vmem>>, %arg11: memref<1x16xf32, #tpu.memory_space<vmem>>, %arg12: memref<2x!tpu.dma_semaphore, #tpu.memory_space<semaphore_mem>>) attributes {dimension_semantics = [#tpu.dimension_semantics<arbitrary>], iteration_bounds = array<i64: 2>, scalar_prefetch = 0 : i64, scratch_operands = 7 : i64, tpu.core_type = #tpu.core_type<tc>, window_params = [{transform_indices = @transform_0, window_bounds = array<i64: 1, 16, 16>}, {transform_indices = @transform_1, window_bounds = array<i64: 1, 16, 16>}, {}, {}, {pipeline_mode = #tpu.pipeline_mode<synchronous>, transform_indices = @transform_4, window_bounds = array<i64: 1, 1>}]} {
    %c0_i32 = arith.constant 0 : i32
    %0 = arith.cmpi eq, %arg0, %c0_i32 : i32
    %1 = arith.extui %0 : i1 to i32
    %c0_i32_0 = arith.constant 0 : i32
    %2 = arith.cmpi ne, %1, %c0_i32_0 : i32
    scf.if %2 {
      %c0_i32_45 = arith.constant 0 : i32
      %85 = tpu.memref_slice %arg12[%c0_i32_45] : memref<2x!tpu.dma_semaphore, #tpu.memory_space<semaphore_mem>> -> memref<1x!tpu.dma_semaphore, #tpu.memory_space<semaphore_mem>>
      %86 = tpu.memref_squeeze %85 : memref<1x!tpu.dma_semaphore, #tpu.memory_space<semaphore_mem>> -> memref<!tpu.dma_semaphore, #tpu.memory_space<semaphore_mem>>
      tpu.enqueue_dma source(%arg3 : memref<32x16xf32, #tpu.memory_space<any>>) target(%arg6 : memref<32x16xf32, #tpu.memory_space<vmem>>) target_semaphore(%86 : memref<!tpu.dma_semaphore, #tpu.memory_space<semaphore_mem>>)
      %c1_i32_46 = arith.constant 1 : i32
      %87 = tpu.memref_slice %arg12[%c1_i32_46] : memref<2x!tpu.dma_semaphore, #tpu.memory_space<semaphore_mem>> -> memref<1x!tpu.dma_semaphore, #tpu.memory_space<semaphore_mem>>
      %88 = tpu.memref_squeeze %87 : memref<1x!tpu.dma_semaphore, #tpu.memory_space<semaphore_mem>> -> memref<!tpu.dma_semaphore, #tpu.memory_space<semaphore_mem>>
      tpu.enqueue_dma source(%arg4 : memref<16x32xf32, #tpu.memory_space<any>>) target(%arg7 : memref<16x32xf32, #tpu.memory_space<vmem>>) target_semaphore(%88 : memref<!tpu.dma_semaphore, #tpu.memory_space<semaphore_mem>>)
      %c0_i32_47 = arith.constant 0 : i32
      %89 = tpu.memref_slice %arg12[%c0_i32_47] : memref<2x!tpu.dma_semaphore, #tpu.memory_space<semaphore_mem>> -> memref<1x!tpu.dma_semaphore, #tpu.memory_space<semaphore_mem>>
      %90 = tpu.memref_squeeze %89 : memref<1x!tpu.dma_semaphore, #tpu.memory_space<semaphore_mem>> -> memref<!tpu.dma_semaphore, #tpu.memory_space<semaphore_mem>>
      tpu.wait_dma2 semaphore(%90 : memref<!tpu.dma_semaphore, #tpu.memory_space<semaphore_mem>>) src(%arg3 : memref<32x16xf32, #tpu.memory_space<any>>) dst(%arg6 : memref<32x16xf32, #tpu.memory_space<vmem>>)
      %c1_i32_48 = arith.constant 1 : i32
      %91 = tpu.memref_slice %arg12[%c1_i32_48] : memref<2x!tpu.dma_semaphore, #tpu.memory_space<semaphore_mem>> -> memref<1x!tpu.dma_semaphore, #tpu.memory_space<semaphore_mem>>
      %92 = tpu.memref_squeeze %91 : memref<1x!tpu.dma_semaphore, #tpu.memory_space<semaphore_mem>> -> memref<!tpu.dma_semaphore, #tpu.memory_space<semaphore_mem>>
      tpu.wait_dma2 semaphore(%92 : memref<!tpu.dma_semaphore, #tpu.memory_space<semaphore_mem>>) src(%arg4 : memref<16x32xf32, #tpu.memory_space<any>>) dst(%arg7 : memref<16x32xf32, #tpu.memory_space<vmem>>)
      %cst_49 = arith.constant 0.000000e+00 : f32
      %93 = vector.broadcast %cst_49 : f32 to vector<1x16xf32>
      %c0_50 = arith.constant 0 : index
      %c0_51 = arith.constant 0 : index
      %94 = vector.load %arg8[%c0_50, %c0_51] : memref<1x16xf32, #tpu.memory_space<vmem>>, vector<1x16xf32>
      tpu.vector_store %arg8[%c0_50, %c0_51], %93 {strides = array<i32>} : memref<1x16xf32, #tpu.memory_space<vmem>>, vector<1x16xf32>,
      %cst_52 = arith.constant 0.000000e+00 : f32
      %95 = vector.broadcast %cst_52 : f32 to vector<1x16xf32>
      %c0_53 = arith.constant 0 : index
      %c0_54 = arith.constant 0 : index
      %96 = vector.load %arg9[%c0_53, %c0_54] : memref<1x16xf32, #tpu.memory_space<vmem>>, vector<1x16xf32>
      tpu.vector_store %arg9[%c0_53, %c0_54], %95 {strides = array<i32>} : memref<1x16xf32, #tpu.memory_space<vmem>>, vector<1x16xf32>,
      %cst_55 = arith.constant 0.000000e+00 : f32
      %97 = vector.broadcast %cst_55 : f32 to vector<1x16xf32>
      %c0_56 = arith.constant 0 : index
      %c0_57 = arith.constant 0 : index
      %98 = vector.load %arg10[%c0_56, %c0_57] : memref<1x16xf32, #tpu.memory_space<vmem>>, vector<1x16xf32>
      tpu.vector_store %arg10[%c0_56, %c0_57], %97 {strides = array<i32>} : memref<1x16xf32, #tpu.memory_space<vmem>>, vector<1x16xf32>,
      %cst_58 = arith.constant 0.000000e+00 : f32
      %99 = vector.broadcast %cst_58 : f32 to vector<1x16xf32>
      %c0_59 = arith.constant 0 : index
      %c0_60 = arith.constant 0 : index
      %100 = vector.load %arg11[%c0_59, %c0_60] : memref<1x16xf32, #tpu.memory_space<vmem>>, vector<1x16xf32>
      tpu.vector_store %arg11[%c0_59, %c0_60], %99 {strides = array<i32>} : memref<1x16xf32, #tpu.memory_space<vmem>>, vector<1x16xf32>,
    } else {
    }
    %c0 = arith.constant 0 : index
    %c0_1 = arith.constant 0 : index
    %c0_2 = arith.constant 0 : index
    %3 = vector.load %arg2[%c0, %c0_1, %c0_2] : memref<1x16x16xf32, #tpu.memory_space<vmem>>, vector<1x16x16xf32>
    %4 = vector.shape_cast %3 : vector<1x16x16xf32> to vector<16x16xf32>
    %c0_3 = arith.constant 0 : index
    %c0_4 = arith.constant 0 : index
    %c0_5 = arith.constant 0 : index
    %5 = vector.load %arg1[%c0_3, %c0_4, %c0_5] : memref<1x16x16xf32, #tpu.memory_space<vmem>>, vector<1x16x16xf32>
    %6 = vector.shape_cast %5 : vector<1x16x16xf32> to vector<16x16xf32>
    %cst = arith.constant 0.000000e+00 : f32
    %7 = vector.broadcast %cst : f32 to vector<1x16xf32>
    %cst_6 = arith.constant 0.000000e+00 : f32
    %8 = vector.broadcast %cst_6 : f32 to vector<16x1xf32>
    %9 = vector.extract_strided_slice %4 {offsets = [0, 0], sizes = [15, 16], strides = [1, 1]} : vector<16x16xf32> to vector<15x16xf32>
    %10 = tpu.concatenate %7, %9 in 0 : vector<1x16xf32>, vector<15x16xf32> -> vector<16x16xf32>
    %11 = arith.addf %4, %10 : vector<16x16xf32>
    %12 = vector.extract_strided_slice %4 {offsets = [1, 0], sizes = [15, 16], strides = [1, 1]} : vector<16x16xf32> to vector<15x16xf32>
    %13 = tpu.concatenate %12, %7 in 0 : vector<15x16xf32>, vector<1x16xf32> -> vector<16x16xf32>
    %14 = arith.addf %11, %13 : vector<16x16xf32>
    %15 = vector.extract_strided_slice %14 {offsets = [0, 0], sizes = [16, 15], strides = [1, 1]} : vector<16x16xf32> to vector<16x15xf32>
    %16 = tpu.concatenate %8, %15 in 1 : vector<16x1xf32>, vector<16x15xf32> -> vector<16x16xf32>
    %17 = arith.addf %14, %16 : vector<16x16xf32>
    %18 = vector.extract_strided_slice %14 {offsets = [0, 1], sizes = [16, 15], strides = [1, 1]} : vector<16x16xf32> to vector<16x15xf32>
    %19 = tpu.concatenate %18, %8 in 1 : vector<16x15xf32>, vector<16x1xf32> -> vector<16x16xf32>
    %20 = arith.addf %17, %19 : vector<16x16xf32>
    %cst_7 = arith.constant 9.000000e+00 : f32
    %21 = vector.broadcast %cst_7 : f32 to vector<16x16xf32>
    %22 = arith.mulf %21, %4 : vector<16x16xf32>
    %23 = arith.subf %22, %20 : vector<16x16xf32>
    %c0_8 = arith.constant 0 : index
    %c0_9 = arith.constant 0 : index
    %24 = vector.load %arg6[%c0_8, %c0_9] : memref<32x16xf32, #tpu.memory_space<vmem>>, vector<32x16xf32>
    %cst_10 = arith.constant dense<0.000000e+00> : vector<32x16xf32>
    %25 = tpu.matmul %24, %23, %cst_10 {dimension_numbers = #tpu.dot_dimension_numbers<[1], [0], [0], [1], [0, 0, 1, 1], [], []>} : vector<32x16xf32>, vector<16x16xf32>, vector<32x16xf32> -> vector<32x16xf32>
    %26 = vector.extract_strided_slice %25 {offsets = [0, 0], sizes = [16, 16], strides = [1, 1]} : vector<32x16xf32> to vector<16x16xf32>
    %c0_11 = arith.constant 0 : index
    %c0_12 = arith.constant 0 : index
    %27 = vector.load %arg7[%c0_11, %c0_12] : memref<16x32xf32, #tpu.memory_space<vmem>>, vector<16x16xf32>
    %cst_13 = arith.constant dense<0.000000e+00> : vector<16x16xf32>
    %28 = tpu.matmul %26, %27, %cst_13 {dimension_numbers = #tpu.dot_dimension_numbers<[1], [0], [0], [1], [0, 0, 1, 1], [], []>} : vector<16x16xf32>, vector<16x16xf32>, vector<16x16xf32> -> vector<16x16xf32>
    %29 = vector.extract_strided_slice %25 {offsets = [16, 0], sizes = [16, 16], strides = [1, 1]} : vector<32x16xf32> to vector<16x16xf32>
    %c0_14 = arith.constant 0 : index
    %c16 = arith.constant 16 : index
    %30 = vector.load %arg7[%c0_14, %c16] : memref<16x32xf32, #tpu.memory_space<vmem>>, vector<16x16xf32>
    %cst_15 = arith.constant dense<0.000000e+00> : vector<16x16xf32>
    %31 = tpu.matmul %29, %30, %cst_15 {dimension_numbers = #tpu.dot_dimension_numbers<[1], [0], [0], [1], [0, 0, 1, 1], [], []>} : vector<16x16xf32>, vector<16x16xf32>, vector<16x16xf32> -> vector<16x16xf32>
    %cst_16 = arith.constant 0.000000e+00 : f32
    %32 = vector.broadcast %cst_16 : f32 to vector<16x16xf32>
    %33 = arith.cmpf one, %23, %32 : vector<16x16xf32>
    %cst_17 = arith.constant 0.000000e+00 : f32
    %34 = vector.broadcast %cst_17 : f32 to vector<16x16xf32>
    %35 = arith.cmpf one, %28, %34 : vector<16x16xf32>
    %36 = arith.ori %33, %35 : vector<16x16xi1>
    %cst_18 = arith.constant 0.000000e+00 : f32
    %37 = vector.broadcast %cst_18 : f32 to vector<16x16xf32>
    %38 = arith.cmpf one, %31, %37 : vector<16x16xf32>
    %39 = arith.ori %36, %38 : vector<16x16xi1>
    %cst_19 = arith.constant 2.550000e+02 : f32
    %40 = vector.broadcast %cst_19 : f32 to vector<16x16xf32>
    %41 = arith.cmpf one, %4, %40 : vector<16x16xf32>
    %42 = arith.andi %39, %41 : vector<16x16xi1>
    %43 = arith.extui %42 : vector<16x16xi1> to vector<16x16xi32>
    %44 = arith.sitofp %43 : vector<16x16xi32> to vector<16x16xf32>
    %cst_20 = arith.constant dense<true> : vector<16x16xi1>
    %45 = arith.xori %39, %cst_20 : vector<16x16xi1>
    %46 = arith.andi %45, %41 : vector<16x16xi1>
    %47 = arith.extui %46 : vector<16x16xi1> to vector<16x16xi32>
    %48 = arith.sitofp %47 : vector<16x16xi32> to vector<16x16xf32>
    %cst_21 = arith.constant 0.000000e+00 : f32
    %49 = vector.broadcast %cst_21 : f32 to vector<16x16xf32>
    %50 = arith.maximumf %6, %49 : vector<16x16xf32>
    %51 = math.absf %6 : vector<16x16xf32>
    %cst_22 = arith.constant 0.000000e+00 : f32
    %52 = vector.broadcast %cst_22 : f32 to vector<16x16xf32>
    %53 = arith.subf %52, %51 : vector<16x16xf32>
    %54 = math.exp %53 : vector<16x16xf32>
    %cst_23 = arith.constant 1.000000e+00 : f32
    %55 = vector.broadcast %cst_23 : f32 to vector<16x16xf32>
    %56 = arith.addf %55, %54 : vector<16x16xf32>
    %57 = math.log %56 : vector<16x16xf32>
    %58 = arith.addf %50, %57 : vector<16x16xf32>
    %c0_24 = arith.constant 0 : index
    %c0_25 = arith.constant 0 : index
    %59 = vector.load %arg8[%c0_24, %c0_25] : memref<1x16xf32, #tpu.memory_space<vmem>>, vector<1x16xf32>
    %cst_26 = arith.constant dense<0.000000e+00> : vector<16xf32>
    %60 = vector.multi_reduction <add>, %44, %cst_26 [0] : vector<16x16xf32> to vector<16xf32>
    %61 = vector.shape_cast %60 : vector<16xf32> to vector<1x16xf32>
    %62 = arith.addf %59, %61 : vector<1x16xf32>
    %c0_27 = arith.constant 0 : index
    %c0_28 = arith.constant 0 : index
    %63 = vector.load %arg8[%c0_27, %c0_28] : memref<1x16xf32, #tpu.memory_space<vmem>>, vector<1x16xf32>
    tpu.vector_store %arg8[%c0_27, %c0_28], %62 {strides = array<i32>} : memref<1x16xf32, #tpu.memory_space<vmem>>, vector<1x16xf32>,
    %c0_29 = arith.constant 0 : index
    %c0_30 = arith.constant 0 : index
    %64 = vector.load %arg9[%c0_29, %c0_30] : memref<1x16xf32, #tpu.memory_space<vmem>>, vector<1x16xf32>
    %cst_31 = arith.constant dense<0.000000e+00> : vector<16xf32>
    %65 = vector.multi_reduction <add>, %48, %cst_31 [0] : vector<16x16xf32> to vector<16xf32>
    %66 = vector.shape_cast %65 : vector<16xf32> to vector<1x16xf32>
    %67 = arith.addf %64, %66 : vector<1x16xf32>
    %c0_32 = arith.constant 0 : index
    %c0_33 = arith.constant 0 : index
    %68 = vector.load %arg9[%c0_32, %c0_33] : memref<1x16xf32, #tpu.memory_space<vmem>>, vector<1x16xf32>
    tpu.vector_store %arg9[%c0_32, %c0_33], %67 {strides = array<i32>} : memref<1x16xf32, #tpu.memory_space<vmem>>, vector<1x16xf32>,
    %c0_34 = arith.constant 0 : index
    %c0_35 = arith.constant 0 : index
    %69 = vector.load %arg10[%c0_34, %c0_35] : memref<1x16xf32, #tpu.memory_space<vmem>>, vector<1x16xf32>
    %70 = arith.subf %58, %6 : vector<16x16xf32>
    %71 = arith.mulf %44, %70 : vector<16x16xf32>
    %cst_36 = arith.constant dense<0.000000e+00> : vector<16xf32>
    %72 = vector.multi_reduction <add>, %71, %cst_36 [0] : vector<16x16xf32> to vector<16xf32>
    %73 = vector.shape_cast %72 : vector<16xf32> to vector<1x16xf32>
    %74 = arith.addf %69, %73 : vector<1x16xf32>
    %c0_37 = arith.constant 0 : index
    %c0_38 = arith.constant 0 : index
    %75 = vector.load %arg10[%c0_37, %c0_38] : memref<1x16xf32, #tpu.memory_space<vmem>>, vector<1x16xf32>
    tpu.vector_store %arg10[%c0_37, %c0_38], %74 {strides = array<i32>} : memref<1x16xf32, #tpu.memory_space<vmem>>, vector<1x16xf32>,
    %c0_39 = arith.constant 0 : index
    %c0_40 = arith.constant 0 : index
    %76 = vector.load %arg11[%c0_39, %c0_40] : memref<1x16xf32, #tpu.memory_space<vmem>>, vector<1x16xf32>
    %77 = arith.mulf %48, %58 : vector<16x16xf32>
    %cst_41 = arith.constant dense<0.000000e+00> : vector<16xf32>
    %78 = vector.multi_reduction <add>, %77, %cst_41 [0] : vector<16x16xf32> to vector<16xf32>
    %79 = vector.shape_cast %78 : vector<16xf32> to vector<1x16xf32>
    %80 = arith.addf %76, %79 : vector<1x16xf32>
    %c0_42 = arith.constant 0 : index
    %c0_43 = arith.constant 0 : index
    %81 = vector.load %arg11[%c0_42, %c0_43] : memref<1x16xf32, #tpu.memory_space<vmem>>, vector<1x16xf32>
    tpu.vector_store %arg11[%c0_42, %c0_43], %80 {strides = array<i32>} : memref<1x16xf32, #tpu.memory_space<vmem>>, vector<1x16xf32>,
    %c1_i32 = arith.constant 1 : i32
    %82 = arith.cmpi eq, %arg0, %c1_i32 : i32
    %83 = arith.extui %82 : i1 to i32
    %c0_i32_44 = arith.constant 0 : i32
    %84 = arith.cmpi ne, %83, %c0_i32_44 : i32
    scf.if %84 {
      %c0_45 = arith.constant 0 : index
      %c0_46 = arith.constant 0 : index
      %85 = vector.load %arg8[%c0_45, %c0_46] : memref<1x16xf32, #tpu.memory_space<vmem>>, vector<1x16xf32>
      %86 = vector.shape_cast %85 : vector<1x16xf32> to vector<1x1x16xf32>
      %cst_47 = arith.constant dense<0.000000e+00> : vector<1xf32>
      %87 = vector.multi_reduction <add>, %86, %cst_47 [1, 2] : vector<1x1x16xf32> to vector<1xf32>
      %88 = vector.shape_cast %87 : vector<1xf32> to vector<1x1x1xf32>
      %89 = vector.extract %88[0, 0, 0] : f32 from vector<1x1x1xf32>
      %90 = vector.broadcast %89 : f32 to vector<1x1xf32>
      %c0_48 = arith.constant 0 : index
      %c0_49 = arith.constant 0 : index
      %91 = vector.load %arg9[%c0_48, %c0_49] : memref<1x16xf32, #tpu.memory_space<vmem>>, vector<1x16xf32>
      %92 = vector.shape_cast %91 : vector<1x16xf32> to vector<1x1x16xf32>
      %cst_50 = arith.constant dense<0.000000e+00> : vector<1xf32>
      %93 = vector.multi_reduction <add>, %92, %cst_50 [1, 2] : vector<1x1x16xf32> to vector<1xf32>
      %94 = vector.shape_cast %93 : vector<1xf32> to vector<1x1x1xf32>
      %95 = vector.extract %94[0, 0, 0] : f32 from vector<1x1x1xf32>
      %96 = vector.broadcast %95 : f32 to vector<1x1xf32>
      %c0_51 = arith.constant 0 : index
      %c0_52 = arith.constant 0 : index
      %97 = vector.load %arg10[%c0_51, %c0_52] : memref<1x16xf32, #tpu.memory_space<vmem>>, vector<1x16xf32>
      %98 = vector.shape_cast %97 : vector<1x16xf32> to vector<1x1x16xf32>
      %cst_53 = arith.constant dense<0.000000e+00> : vector<1xf32>
      %99 = vector.multi_reduction <add>, %98, %cst_53 [1, 2] : vector<1x1x16xf32> to vector<1xf32>
      %100 = vector.shape_cast %99 : vector<1xf32> to vector<1x1x1xf32>
      %101 = vector.extract %100[0, 0, 0] : f32 from vector<1x1x1xf32>
      %102 = vector.broadcast %101 : f32 to vector<1x1xf32>
      %c0_54 = arith.constant 0 : index
      %c0_55 = arith.constant 0 : index
      %103 = vector.load %arg11[%c0_54, %c0_55] : memref<1x16xf32, #tpu.memory_space<vmem>>, vector<1x16xf32>
      %104 = vector.shape_cast %103 : vector<1x16xf32> to vector<1x1x16xf32>
      %cst_56 = arith.constant dense<0.000000e+00> : vector<1xf32>
      %105 = vector.multi_reduction <add>, %104, %cst_56 [1, 2] : vector<1x1x16xf32> to vector<1xf32>
      %106 = vector.shape_cast %105 : vector<1xf32> to vector<1x1x1xf32>
      %107 = vector.extract %106[0, 0, 0] : f32 from vector<1x1x1xf32>
      %108 = vector.broadcast %107 : f32 to vector<1x1xf32>
      %109 = arith.addf %90, %96 : vector<1x1xf32>
      %110 = arith.divf %96, %109 : vector<1x1xf32>
      %111 = arith.mulf %110, %102 : vector<1x1xf32>
      %112 = arith.divf %90, %109 : vector<1x1xf32>
      %113 = arith.mulf %112, %108 : vector<1x1xf32>
      %114 = arith.addf %111, %113 : vector<1x1xf32>
      %cst_57 = arith.constant 0.001953125 : f32
      %115 = vector.broadcast %cst_57 : f32 to vector<1x1xf32>
      %116 = arith.mulf %114, %115 : vector<1x1xf32>
      %c0_58 = arith.constant 0 : index
      %c0_59 = arith.constant 0 : index
      %117 = vector.load %arg5[%c0_58, %c0_59] : memref<1x1xf32, #tpu.memory_space<vmem>>, vector<1x1xf32>
      tpu.vector_store %arg5[%c0_58, %c0_59], %116 {strides = array<i32>} : memref<1x1xf32, #tpu.memory_space<vmem>>, vector<1x1xf32>,
    } else {
    }
    return
  }
  func.func @transform_0(%arg0: i32) -> (i32, i32, i32) {
    %c0_i32 = arith.constant 0 : i32
    %c0_i32_0 = arith.constant 0 : i32
    %c0_i32_1 = arith.constant 0 : i32
    return %arg0, %c0_i32, %c0_i32_0 : i32, i32, i32
  }
  func.func @transform_1(%arg0: i32) -> (i32, i32, i32) {
    %c0_i32 = arith.constant 0 : i32
    %c0_i32_0 = arith.constant 0 : i32
    %c0_i32_1 = arith.constant 0 : i32
    return %arg0, %c0_i32, %c0_i32_0 : i32, i32, i32
  }
  func.func @transform_4(%arg0: i32) -> (i32, i32) {
    %c0_i32 = arith.constant 0 : i32
    %c0_i32_0 = arith.constant 0 : i32
    %c0_i32_1 = arith.constant 0 : i32
    return %c0_i32, %c0_i32_0 : i32, i32
  }
}

</mosaic_0001>

<llo_original>
// kernel: tpu_custom_call.1
$region0: #{tpu_custom_call.1}
  #allocation0 [shape = 'u32[]', space=smem, size = 0x4, offset = 0x4, fixed_abs, tag = 'smem constant byte address 0x4 - core index']
  #allocation1 [shape = 'u32[72,128]{1,0:T(1,128)}', space=vmem, size = 0x9000, scoped, tag = 'internal scratch']
  #allocation2 [shape = 'f32[32,16]{1,0:T(8,128)}', space=vmem, size = 0x4000, scoped, tag = 'scratch operand']
  #allocation3 [shape = 'f32[16,32]{1,0:T(8,128)}', space=vmem, size = 0x2000, scoped, tag = 'scratch operand']
  #allocation4 [shape = 'f32[1,16]{1,0:T(1,128)}', space=vmem, size = 0x200, scoped, tag = 'scratch operand']
  #allocation5 [shape = 'f32[1,16]{1,0:T(1,128)}', space=vmem, size = 0x200, scoped, tag = 'scratch operand']
  #allocation6 [shape = 'f32[1,16]{1,0:T(1,128)}', space=vmem, size = 0x200, scoped, tag = 'scratch operand']
  #allocation7 [shape = 'f32[1,16]{1,0:T(1,128)}', space=vmem, size = 0x200, scoped, tag = 'scratch operand']
  #allocation8 [shape = 's32[2]{0}', space=sflag, size = 0x8, scoped, tag = 'scratch operand']
  #allocation13 [shape = 's32[]', space=sflag, size = 0x4, offset = 0, fixed_abs, tag = 'sflag constant byte address 0x0 - dummy sync flag']
  #allocation14 [shape = 's32[]', space=sflag, size = 0x4, offset = 0, fixed_abs, tag = 'sflag constant byte address 0x0 - dummy sync flag']
  %s0 = inlined_call_operand.vmem [shape: f32[2,16,16], index: 0, kind: input, shape index: {}]
  %s1 = inlined_call_operand.hbm [shape: f32[2,16,16], index: 1, kind: input, shape index: {}]
  %s2 = inlined_call_operand.vmem [shape: f32[32,16], index: 2, kind: input, shape index: {}]
  %s3 = inlined_call_operand.vmem [shape: f32[16,32], index: 3, kind: input, shape index: {}]
  %s4 = inlined_call_operand.hbm [shape: f32[1,1], index: 4, kind: output, shape index: {}]
  %s5 = sld [smem:[#allocation0]]
  $region91: #{tpu_custom_call.1} parent=0
    _
  %s7 = ssub.s32 1, %s5
  %s8 = scalar_select 0, %s7, %s5
  $region1: #{tpu_custom_call.1} parent=0
    #allocation9 [shape = 'u8[16384]{0}', space=vmem, size = 0x4000, scoped, tag = 'input window, operand 1']
    #allocation10 [shape = 's32[2]{0}', space=sflag, size = 0x8, scoped, tag = 'scoped memory for tpu_custom_call.1']
    #allocation11 [shape = 's32[2]{0}', space=sflag, size = 0x8, scoped, tag = 'scoped memory for tpu_custom_call.1']
    #allocation12 [shape = 'u8[512]{0}', space=vmem, size = 0x400, scoped, tag = 'output window, operand 0, single buffered']
    %9 = vsyncpa [#allocation10], 0
    %s10 = scalar_lea.sflag [#allocation10], 1
    %11 = vsyncpa %s10, 0
    %12 = vsyncpa [#allocation11], 0
    loop: start=0, step=1, limit=4
    $region2: #{tpu_custom_call.1} parent=1 // loop_pre_header
      _
    $region3: #{tpu_custom_call.1} parent=1 // loop_header
      %s14 = sphi 0, %s18
      %p15 = scmp.ge.s32.totalorder %s14, 4
      %s24 = sphi 0, %s26
      %s27 = sphi 0, %s24
      %s28 = sphi 0, %s27
      %s44 = sphi 0, %s28
      %s50 = sphi 0, %s52
      %s53 = sphi 0, %s50
      %s54 = sphi 0, %s53
      %s70 = sphi 0, %s54
      %s74 = sphi 0, %s74
      %s76 = sphi 0, %s74
      %s77 = sphi 0, %s76
      %s91 = sphi 0, %s77
    $region4: #{tpu_custom_call.1} parent=1 // loop_header_branch
      %17 = sbr.rel (%p15) target = $region8
    $region5: #{tpu_custom_call.1} parent=1 // loop_body
      %s19 = ssub.s32 %s14, 1
      %s20 = ssub.s32 %s14, 2
      %s21 = sadd.s32 %s14, 1
      %s22 = ssub.s32 %s14, %s21
      %p23 = scmp.eq.s32.totalorder %s22, 0
      %s25 = sadd.s32 %s24, 1
      %s26 = scalar_select %p23, %s24, %s25
      %p29 = pneg %p23
      %p30 = scmp.eq.s32.totalorder %s14, 1
      %p31 = por %p29, %p30
      %p32 = scmp.ne.s32.totalorder %s24, %s27
      %p33 = scmp.eq.s32.totalorder %s14, 0
      %p34 = por %p32, %p33
      %p35 = scmp.ne.s32.totalorder %s24, %s27
      %p36 = scmp.eq.s32.totalorder %s19, 1
      %p37 = por %p35, %p36
      %p38 = scmp.ne.s32.totalorder %s27, %s28
      %p39 = scmp.eq.s32.totalorder %s19, 0
      %p40 = por %p38, %p39
      %p41 = scmp.ne.s32.totalorder %s27, %s28
      %p42 = scmp.eq.s32.totalorder %s20, 1
      %p43 = por %p41, %p42
      %p45 = scmp.ne.s32.totalorder %s28, %s44
      %p46 = scmp.eq.s32.totalorder %s20, 0
      %p47 = por %p45, %p46
      %s48 = ssub.s32 %s14, %s21
      %p49 = scmp.eq.s32.totalorder %s48, 0
      %s51 = sadd.s32 %s50, 1
      %s52 = scalar_select %p49, %s50, %s51
      %p55 = pneg %p49
      %p56 = scmp.eq.s32.totalorder %s14, 1
      %p57 = por %p55, %p56
      %p58 = scmp.ne.s32.totalorder %s50, %s53
      %p59 = scmp.eq.s32.totalorder %s14, 0
      %p60 = por %p58, %p59
      %p61 = scmp.ne.s32.totalorder %s50, %s53
      %p62 = scmp.eq.s32.totalorder %s19, 1
      %p63 = por %p61, %p62
      %p64 = scmp.ne.s32.totalorder %s53, %s54
      %p65 = scmp.eq.s32.totalorder %s19, 0
      %p66 = por %p64, %p65
      %p67 = scmp.ne.s32.totalorder %s53, %s54
      %p68 = scmp.eq.s32.totalorder %s20, 1
      %p69 = por %p67, %p68
      %p71 = scmp.ne.s32.totalorder %s54, %s70
      %p72 = scmp.eq.s32.totalorder %s20, 0
      %p73 = por %p71, %p72
      %s75 = sadd.s32 %s74, 1
      %p78 = scmp.eq.s32.totalorder %s14, 1
      %p79 = scmp.ne.s32.totalorder %s74, %s76
      %p80 = scmp.eq.s32.totalorder %s14, 0
      %p81 = por %p79, %p80
      %p82 = scmp.ne.s32.totalorder %s74, %s76
      %p83 = scmp.eq.s32.totalorder %s19, 1
      %p84 = por %p82, %p83
      %p85 = scmp.ne.s32.totalorder %s76, %s77
      %p86 = scmp.eq.s32.totalorder %s19, 0
      %p87 = por %p85, %p86
      %p88 = scmp.ne.s32.totalorder %s76, %s77
      %p89 = scmp.eq.s32.totalorder %s20, 1
      %p90 = por %p88, %p89
      %p92 = scmp.ne.s32.totalorder %s77, %s91
      %p93 = scmp.eq.s32.totalorder %s20, 0
      %p94 = por %p92, %p93
      %p95 = scmp.le.s32.totalorder 1, %s14
      %p96 = scmp.lt.s32.totalorder %s14, 3
      %p97 = pnand %p95, %p96
      %p98 = pneg %p97
      // Predicated region
      $region9: #{tpu_custom_call.1} parent=5 // pred_check
        _
      $region10: #{tpu_custom_call.1} parent=5 // pred_check_branch
        %100 = sbr.rel (%p97) target = $region12
      $region11: #{tpu_custom_call.1} parent=5 // pred_region
        %s101 = ssub.s32 %s14, 1
      $region12: #{tpu_custom_call.1} parent=5 // pred_fallthru
        _
      %p102 = scmp.lt.s32.totalorder %s14, 2
      // Predicated region
      $region13: #{tpu_custom_call.1} parent=5 // pred_check
        %p103 = pneg %p102
      $region14: #{tpu_custom_call.1} parent=5 // pred_check_branch
        %105 = sbr.rel (%p103) target = $region16
      $region15: #{tpu_custom_call.1} parent=5 // pred_region
        // Predicated region
        $region17: #{tpu_custom_call.1} parent=15 // pred_check
          %p106 = pneg %p34
        $region18: #{tpu_custom_call.1} parent=15 // pred_check_branch
          %108 = sbr.rel (%p106) target = $region20
        $region19: #{tpu_custom_call.1} parent=15 // pred_region
          %p109 = scmp.lt.s32.totalorder %s14, 1
          %s110 = scalar_select %p109, %s14, 1
          %s111 = smul.addr %s110, 2
          %s112 = smul.addr %s111, 8
          %s113 = scalar_lea.vmem %s0, %s112
        $region20: #{tpu_custom_call.1} parent=15 // pred_fallthru
          _
        // Predicated region
        $region21: #{tpu_custom_call.1} parent=15 // pred_check
          %p114 = pneg %p60
        $region22: #{tpu_custom_call.1} parent=15 // pred_check_branch
          %116 = sbr.rel (%p114) target = $region24
        $region23: #{tpu_custom_call.1} parent=15 // pred_region
          %s117 = sand.u32 %s50, 1
          %s118 = scalar_lea.sflag [#allocation10], %s117
          %s119 = sand.u32 %s50, 1
          %s120 = smul.addr %s119, 16
          %s121 = scalar_lea.vmem [#allocation9], %s120
          %123 = vsyncadd %s118, 0
          %s124 = smul.addr %s14, 2
          %s125 = smul.addr %s124, 8
          %s126 = scalar_lea.hbm %s1, %s125
          %s127 = sshll.u32 %s126, 4
          %s128 = int_to_ptr.hbm [resolvable:$true] %s127
          %s129 = sshll.u32 %s121, 4
          %s130 = int_to_ptr.vmem [resolvable:$true] %s129
          %135 = dma.hbm_to_vmem [thread:$0]  %s128, 256, %s130, %s118, 128, 128, 8
        $region24: #{tpu_custom_call.1} parent=15 // pred_fallthru
          _
      $region16: #{tpu_custom_call.1} parent=5 // pred_fallthru
        _
      %p136 = scmp.le.s32.totalorder 1, %s14
      %p137 = scmp.lt.s32.totalorder %s14, 3
      %p138 = pnand %p136, %p137
      %p139 = pneg %p138
      // Predicated region
      $region25: #{tpu_custom_call.1} parent=5 // pred_check
        _
      $region26: #{tpu_custom_call.1} parent=5 // pred_check_branch
        %141 = sbr.rel (%p138) target = $region28
      $region27: #{tpu_custom_call.1} parent=5 // pred_region
        %s142 = ssub.s32 %s14, 1
        %s143 = sand.u32 %s53, 1
        %s144 = scalar_lea.sflag [#allocation10], %s143
        %s145 = sand.u32 %s53, 1
        %s146 = smul.addr %s145, 16
        %s147 = scalar_lea.vmem [#allocation9], %s146
        // Predicated region
        $region29: #{tpu_custom_call.1} parent=27 // pred_check
          %p148 = pneg %p66
        $region30: #{tpu_custom_call.1} parent=27 // pred_check_branch
          %150 = sbr.rel (%p148) target = $region32
        $region31: #{tpu_custom_call.1} parent=27 // pred_region
          %152 = dma.done %s144, 256
        $region32: #{tpu_custom_call.1} parent=27 // pred_fallthru
          _
        %p153 = scmp.lt.s32.totalorder %s19, 1
        %s154 = scalar_select %p153, %s19, 1
        %s155 = smul.addr %s154, 2
        %s156 = smul.addr %s155, 8
        %s157 = scalar_lea.vmem %s0, %s156
        %p158 = pneg %p40
        %p159 = pneg %p37
        %s160 = sand.u32 %s53, 1
        %s161 = scalar_lea.sflag [#allocation10], %s160
        %s162 = sand.u32 %s53, 1
        %s163 = smul.addr %s162, 16
        %s164 = scalar_lea.vmem [#allocation9], %s163
        %p165 = pneg %p66
        %p166 = pneg %p63
        %p167 = pneg %p87
        %p168 = pneg %p84
        %p169 = scmp.lt.s32.totalorder %s19, 1
        %s170 = scalar_select %p169, %s19, 1
        %s171 = smul.addr %s170, 2
        %s172 = smul.addr %s171, 8
        %s173 = scalar_lea.vmem %s0, %s172
        %p174 = scmp.eq.s32.totalorder %s19, 0
        // Predicated region
        $region33: #{tpu_custom_call.1} parent=27 // pred_check
          %p175 = pneg %p174
        $region34: #{tpu_custom_call.1} parent=27 // pred_check_branch
          %177 = sbr.rel (%p175) target = $region36
        $region35: #{tpu_custom_call.1} parent=27 // pred_region
          // Predicated region
          $region37: #{tpu_custom_call.1} parent=35 // pred_check
            _
          $region38: #{tpu_custom_call.1} parent=35 // pred_check_branch
            %179 = sbr.rel (0) target = $region40
          $region39: #{tpu_custom_call.1} parent=35 // pred_region
            loop: start=0, step=1, limit=1
            $region41: #{tpu_custom_call.1} parent=39 // loop_pre_header
              _
            $region42: #{tpu_custom_call.1} parent=39 // loop_header
              %s181 = sphi 0, %s185
              %p182 = scmp.ge.s32.totalorder %s181, 1
              %s186 = sphi %s2, %s2
              %s187 = sphi [#allocation2], [#allocation2]
            $region43: #{tpu_custom_call.1} parent=39 // loop_header_branch
              %184 = sbr.rel (%p182) target = $region47
            $region44: #{tpu_custom_call.1} parent=39 // loop_body
              %v188 = vld [vmem:[%s186] sm:$0xff]
              %189 = vst [vmem:[%s187] sm:$0xff] %v188
              %v190 = vld [vmem:[%s186 + $0x8] sm:$0xff]
              %191 = vst [vmem:[%s187 + $0x8] sm:$0xff] %v190
              %v192 = vld [vmem:[%s186 + $0x10] sm:$0xff]
              %193 = vst [vmem:[%s187 + $0x10] sm:$0xff] %v192
              %v194 = vld [vmem:[%s186 + $0x18] sm:$0xff]
              %195 = vst [vmem:[%s187 + $0x18] sm:$0xff] %v194
            $region45: #{tpu_custom_call.1} parent=39 // loop_footer
              %s185 = sadd.s32 1, %s181
            $region46: #{tpu_custom_call.1} parent=39 // loop_footer_branch
              %180 = sbr.rel target = $region42
            $region47: #{tpu_custom_call.1} parent=39 // loop_exit
              _
          $region40: #{tpu_custom_call.1} parent=35 // pred_fallthru
            _
          // Predicated region
          $region48: #{tpu_custom_call.1} parent=35 // pred_check
            _
          $region49: #{tpu_custom_call.1} parent=35 // pred_check_branch
            %197 = sbr.rel target = $region51
          $region50: #{tpu_custom_call.1} parent=35 // pred_region
            _
          $region51: #{tpu_custom_call.1} parent=35 // pred_fallthru
            _
          // Predicated region
          $region52: #{tpu_custom_call.1} parent=35 // pred_check
            _
          $region53: #{tpu_custom_call.1} parent=35 // pred_check_branch
            %200 = sbr.rel (0) target = $region55
          $region54: #{tpu_custom_call.1} parent=35 // pred_region
            %201 = vsyncadd [#allocation8], 512
          $region55: #{tpu_custom_call.1} parent=35 // pred_fallthru
            _
          %s202 = scalar_lea.sflag [#allocation8], 1
          // Predicated region
          $region56: #{tpu_custom_call.1} parent=35 // pred_check
            _
          $region57: #{tpu_custom_call.1} parent=35 // pred_check_branch
            %204 = sbr.rel (0) target = $region59
          $region58: #{tpu_custom_call.1} parent=35 // pred_region
            loop: start=0, step=1, limit=1
            $region60: #{tpu_custom_call.1} parent=58 // loop_pre_header
              _
            $region61: #{tpu_custom_call.1} parent=58 // loop_header
              %s206 = sphi 0, %s210
              %p207 = scmp.ge.s32.totalorder %s206, 1
              %s211 = sphi %s3, %s3
              %s212 = sphi [#allocation3], [#allocation3]
            $region62: #{tpu_custom_call.1} parent=58 // loop_header_branch
              %209 = sbr.rel (%p207) target = $region66
            $region63: #{tpu_custom_call.1} parent=58 // loop_body
              %v213 = vld [vmem:[%s211] sm:$0xff]
              %214 = vst [vmem:[%s212] sm:$0xff] %v213
              %v215 = vld [vmem:[%s211 + $0x8] sm:$0xff]
              %216 = vst [vmem:[%s212 + $0x8] sm:$0xff] %v215
            $region64: #{tpu_custom_call.1} parent=58 // loop_footer
              %s210 = sadd.s32 1, %s206
            $region65: #{tpu_custom_call.1} parent=58 // loop_footer_branch
              %205 = sbr.rel target = $region61
            $region66: #{tpu_custom_call.1} parent=58 // loop_exit
              _
          $region59: #{tpu_custom_call.1} parent=35 // pred_fallthru
            _
          // Predicated region
          $region67: #{tpu_custom_call.1} parent=35 // pred_check
            _
          $region68: #{tpu_custom_call.1} parent=35 // pred_check_branch
            %218 = sbr.rel target = $region70
          $region69: #{tpu_custom_call.1} parent=35 // pred_region
            _
          $region70: #{tpu_custom_call.1} parent=35 // pred_fallthru
            _
          // Predicated region
          $region71: #{tpu_custom_call.1} parent=35 // pred_check
            _
          $region72: #{tpu_custom_call.1} parent=35 // pred_check_branch
            %221 = sbr.rel (0) target = $region74
          $region73: #{tpu_custom_call.1} parent=35 // pred_region
            %222 = vsyncadd %s202, 256
          $region74: #{tpu_custom_call.1} parent=35 // pred_fallthru
            _
          %s223 = smul.u32 32, 1
          %s224 = sshll.u32 %s223, 4
          %225 = dma.done [#allocation8], %s224
          %s226 = smul.u32 16, 1
          %s227 = sshll.u32 %s226, 4
          %228 = dma.done %s202, %s227
          %vm229 = vcmask 122880
          %230 = vst.msk [vmem:[#allocation4] sm:$0x1] %vm229, 0.0
          %231 = vst.msk [vmem:[#allocation5] sm:$0x1] %vm229, 0.0
          %232 = vst.msk [vmem:[#allocation6] sm:$0x1] %vm229, 0.0
          %233 = vst.msk [vmem:[#allocation7] sm:$0x1] %vm229, 0.0
        $region36: #{tpu_custom_call.1} parent=27 // pred_fallthru
          _
        %v234 = vld [vmem:[%s147] sm:$0xff]
        %v235 = vld [vmem:[%s147 + $0x8] sm:$0xff]
        %v236 = vld [vmem:[%s173] sm:$0xff]
        %v237 = vld [vmem:[%s173 + $0x8] sm:$0xff]
        %vm240 = vcmask 1040384
        %v241 = vrot.slane %v234, 7
        %v242 = vrot.slane %v235, 7
        %v243 = vsel %vm240, %v241, %v242
        %v246 = vsel %vm240, 0.0, %v241
        %v247 = vadd.f32 %v234, %v246
        %v248 = vadd.f32 %v235, %v243
        %vm249 = vcmask 1046528
        %v250 = vrot.slane %v234, 1
        %v251 = vrot.slane %v235, 1
        %v252 = vsel %vm249, %v250, %v251
        %v255 = vsel %vm249, %v251, 0.0
        %v256 = vadd.f32 %v247, %v252
        %v257 = vadd.f32 %v248, %v255
        %260 = vrot.lane.b32.xlu0 %v256, 1
        %v261 = vpop.permute.xlu0 %260
        %262 = vrot.lane.b32.xlu0 %v257, 1
        %v263 = vpop.permute.xlu0 %262
        %vm266 = vcmask 7168
        %v267 = vsel %vm266, 0.0, %v261
        %v268 = vsel %vm266, 0.0, %v263
        %v269 = vadd.f32 %v256, %v267
        %v270 = vadd.f32 %v257, %v268
        %271 = vrot.lane.b32.xlu0 %v256, 127
        %v272 = vpop.permute.xlu0 %271
        %273 = vrot.lane.b32.xlu0 %v257, 127
        %v274 = vpop.permute.xlu0 %273
        %vm277 = vcmask 121856
        %v278 = vsel %vm277, %v272, 0.0
        %v279 = vsel %vm277, %v274, 0.0
        %v280 = vadd.f32 %v269, %v278
        %v281 = vadd.f32 %v270, %v279
        %v282 = vmul.f32 %v234, 9.0
        %v283 = vmul.f32 %v235, 9.0
        %v284 = vsub.f32 %v282, %v280
        %v285 = vsub.f32 %v283, %v281
        %v286 = vld [vmem:[#allocation2] sm:$0xff]
        %v287 = vld [vmem:[#allocation2 + $0x8] sm:$0xff]
        %v288 = vld [vmem:[#allocation2 + $0x10] sm:$0xff]
        %v289 = vld [vmem:[#allocation2 + $0x18] sm:$0xff]
        %vm290 = vcmask 130048
        %v292 = vsel %vm290, %v286, 0
        %v295 = vsel %vm290, %v287, 0
        %v298 = vsel %vm290, %v288, 0
        %v301 = vsel %vm290, %v289, 0
        %303 = vmatpush.msra.mxu0 0.0
        %304 = vmatpush.msra.mxu0 0.0
        %305 = vmatpush.msra.mxu0 0.0
        %306 = vmatpush.msra.mxu0 0.0
        %307 = vmatpush.msra.mxu0 0.0
        %308 = vmatpush.msra.mxu0 0.0
        %309 = vmatpush.msra.mxu0 0.0
        %310 = vmatpush.msra.mxu0 0.0
        %311 = vmatpush.msra.mxu0 0.0
        %312 = vmatpush.msra.mxu0 0.0
        %313 = vmatpush.msra.mxu0 0.0
        %314 = vmatpush.msra.mxu0 0.0
        %315 = vmatpush.msra.mxu0 0.0
        %316 = vmatpush.msra.mxu0 0.0
        %317 = vmatpush.msra.mxu0 %v285
        %318 = vmatpush.msra.mxu0 %v284
        %319 = vmatmul.f32.gmra.mxu0 %v292
        %v320 = vpop.f32.mrf.mxu0
        %v321 = vadd.f32 0.0, %v320
        %322 = vmatmul.f32.gmra.mxu0 %v295
        %v323 = vpop.f32.mrf.mxu0
        %v324 = vadd.f32 0.0, %v323
        %325 = vmatmul.f32.gmra.mxu0 %v298
        %v326 = vpop.f32.mrf.mxu0
        %v327 = vadd.f32 0.0, %v326
        %328 = vmatmul.f32.gmra.mxu0 %v301
        %v329 = vpop.f32.mrf.mxu0
        %v330 = vadd.f32 0.0, %v329
        %331 = vdwg.mxu0
        %v332 = vld [vmem:[#allocation3] sm:$0xff]
        %v333 = vld [vmem:[#allocation3 + $0x8] sm:$0xff]
        %v335 = vsel %vm290, %v321, 0
        %v338 = vsel %vm290, %v324, 0
        %340 = vmatpush.msra.mxu0 0.0
        %341 = vmatpush.msra.mxu0 0.0
        %342 = vmatpush.msra.mxu0 0.0
        %343 = vmatpush.msra.mxu0 0.0
        %344 = vmatpush.msra.mxu0 0.0
        %345 = vmatpush.msra.mxu0 0.0
        %346 = vmatpush.msra.mxu0 0.0
        %347 = vmatpush.msra.mxu0 0.0
        %348 = vmatpush.msra.mxu0 0.0
        %349 = vmatpush.msra.mxu0 0.0
        %350 = vmatpush.msra.mxu0 0.0
        %351 = vmatpush.msra.mxu0 0.0
        %352 = vmatpush.msra.mxu0 0.0
        %353 = vmatpush.msra.mxu0 0.0
        %354 = vmatpush.msra.mxu0 %v333
        %355 = vmatpush.msra.mxu0 %v332
        %356 = vmatmul.f32.gmra.mxu0 %v335
        %v357 = vpop.f32.mrf.mxu0
        %v358 = vadd.f32 0.0, %v357
        %359 = vmatmul.f32.gmra.mxu0 %v338
        %v360 = vpop.f32.mrf.mxu0
        %v361 = vadd.f32 0.0, %v360
        %362 = vdwg.mxu0
        %365 = vrot.lane.b32.xlu0 %v332, 112
        %v366 = vpop.permute.xlu0 %365
        %367 = vrot.lane.b32.xlu0 %v333, 112
        %v368 = vpop.permute.xlu0 %367
        %v372 = vsel %vm290, %v327, 0
        %v375 = vsel %vm290, %v330, 0
        %377 = vmatpush.msra.mxu0 0.0
        %378 = vmatpush.msra.mxu0 0.0
        %379 = vmatpush.msra.mxu0 0.0
        %380 = vmatpush.msra.mxu0 0.0
        %381 = vmatpush.msra.mxu0 0.0
        %382 = vmatpush.msra.mxu0 0.0
        %383 = vmatpush.msra.mxu0 0.0
        %384 = vmatpush.msra.mxu0 0.0
        %385 = vmatpush.msra.mxu0 0.0
        %386 = vmatpush.msra.mxu0 0.0
        %387 = vmatpush.msra.mxu0 0.0
        %388 = vmatpush.msra.mxu0 0.0
        %389 = vmatpush.msra.mxu0 0.0
        %390 = vmatpush.msra.mxu0 0.0
        %391 = vmatpush.msra.mxu0 %v368
        %392 = vmatpush.msra.mxu0 %v366
        %393 = vmatmul.f32.gmra.mxu0 %v372
        %v394 = vpop.f32.mrf.mxu0
        %v395 = vadd.f32 0.0, %v394
        %396 = vmatmul.f32.gmra.mxu0 %v375
        %v397 = vpop.f32.mrf.mxu0
        %v398 = vadd.f32 0.0, %v397
        %399 = vdwg.mxu0
        %vm400 = vcmp.ne.f32.partialorder %v284, 0.0
        %vm401 = vcmp.ne.f32.partialorder %v285, 0.0
        %vm402 = vcmp.ne.f32.partialorder %v358, 0.0
        %vm403 = vcmp.ne.f32.partialorder %v361, 0.0
        %vm404 = vmor %vm400, %vm402
        %vm405 = vmor %vm401, %vm403
        %vm406 = vcmp.ne.f32.partialorder %v395, 0.0
        %vm407 = vcmp.ne.f32.partialorder %v398, 0.0
        %vm408 = vmor %vm404, %vm406
        %vm409 = vmor %vm405, %vm407
        %vm410 = vcmp.ne.f32.partialorder %v234, 255.0
        %vm411 = vcmp.ne.f32.partialorder %v235, 255.0
        %vm412 = vmand %vm408, %vm410
        %vm413 = vmand %vm409, %vm411
        %v414 = vsel %vm412, 1, 0
        %v415 = vsel %vm413, 1, 0
        %v416 = vcvt.s32.f32 %v414
        %v417 = vcvt.s32.f32 %v415
        %vm418 = vmxor %vm408, 1
        %vm419 = vmxor %vm409, 1
        %vm420 = vmand %vm418, %vm410
        %vm421 = vmand %vm419, %vm411
        %v422 = vsel %vm420, 1, 0
        %v423 = vsel %vm421, 1, 0
        %v424 = vcvt.s32.f32 %v422
        %v425 = vcvt.s32.f32 %v423
        %v426 = vmax.f32 %v236, 0.0
        %v427 = vmax.f32 %v237, 0.0
        %v428 = vand.u32 2147483647, %v236
        %v429 = vand.u32 2147483647, %v237
        %v430 = vsub.f32 0.0, %v428
        %v431 = vsub.f32 0.0, %v429
        %v432 = vmul.f32 %v430, 1.442695
        %v433 = vpow.pop %v432
        %v434 = vmul.f32 %v431, 1.442695
        %v435 = vpow.pop %v434
        %v436 = vadd.f32 %v433, 1.0
        %v437 = vadd.f32 %v435, 1.0
        %v438 = vlog2.pop %v436
        %v439 = vmul.f32 %v438, 0.6931472
        %v440 = vlog2.pop %v437
        %v441 = vmul.f32 %v440, 0.6931472
        %v442 = vadd.f32 %v426, %v439
        %v443 = vadd.f32 %v427, %v441
        %v444 = vld [vmem:[#allocation4] sm:$0x1]
        %v445 = vsel %vm290, %v416, 0.0
        %v446 = vsel %vm290, %v417, 0.0
        %v447 = vadd.f32 %v445, %v446
        %v448 = vrot.slane %v447, 4
        %v449 = vadd.f32 %v447, %v448
        %v450 = vrot.slane %v449, 2
        %v451 = vadd.f32 %v449, %v450
        %v452 = vrot.slane %v451, 1
        %v453 = vadd.f32 %v451, %v452
        %v454 = vadd.f32 %v444, %v453
        %vm455 = vcmask 122880
        %456 = vst.msk [vmem:[#allocation4] sm:$0x1] %vm455, %v454
        %v457 = vld [vmem:[#allocation5] sm:$0x1]
        %v458 = vsel %vm290, %v424, 0.0
        %v459 = vsel %vm290, %v425, 0.0
        %v460 = vadd.f32 %v458, %v459
        %v461 = vrot.slane %v460, 4
        %v462 = vadd.f32 %v460, %v461
        %v463 = vrot.slane %v462, 2
        %v464 = vadd.f32 %v462, %v463
        %v465 = vrot.slane %v464, 1
        %v466 = vadd.f32 %v464, %v465
        %v467 = vadd.f32 %v457, %v466
        %468 = vst.msk [vmem:[#allocation5] sm:$0x1] %vm455, %v467
        %v469 = vld [vmem:[#allocation6] sm:$0x1]
        %v470 = vsub.f32 %v442, %v236
        %v471 = vsub.f32 %v443, %v237
        %v472 = vmul.f32 %v416, %v470
        %v473 = vmul.f32 %v417, %v471
        %v474 = vsel %vm290, %v472, 0.0
        %v475 = vsel %vm290, %v473, 0.0
        %v476 = vadd.f32 %v474, %v475
        %v477 = vrot.slane %v476, 4
        %v478 = vadd.f32 %v476, %v477
        %v479 = vrot.slane %v478, 2
        %v480 = vadd.f32 %v478, %v479
        %v481 = vrot.slane %v480, 1
        %v482 = vadd.f32 %v480, %v481
        %v483 = vadd.f32 %v469, %v482
        %484 = vst.msk [vmem:[#allocation6] sm:$0x1] %vm455, %v483
        %v485 = vld [vmem:[#allocation7] sm:$0x1]
        %v486 = vmul.f32 %v424, %v442
        %v487 = vmul.f32 %v425, %v443
        %v488 = vsel %vm290, %v486, 0.0
        %v489 = vsel %vm290, %v487, 0.0
        %v490 = vadd.f32 %v488, %v489
        %v491 = vrot.slane %v490, 4
        %v492 = vadd.f32 %v490, %v491
        %v493 = vrot.slane %v492, 2
        %v494 = vadd.f32 %v492, %v493
        %v495 = vrot.slane %v494, 1
        %v496 = vadd.f32 %v494, %v495
        %v497 = vadd.f32 %v485, %v496
        %498 = vst.msk [vmem:[#allocation7] sm:$0x1] %vm455, %v497
        %p499 = scmp.eq.s32.totalorder %s19, 1
        // Predicated region
        $region75: #{tpu_custom_call.1} parent=27 // pred_check
          %p500 = pneg %p499
        $region76: #{tpu_custom_call.1} parent=27 // pred_check_branch
          %502 = sbr.rel (%p500) target = $region78
        $region77: #{tpu_custom_call.1} parent=27 // pred_region
          %v503 = vld [vmem:[#allocation4] sm:$0x1]
          %v504 = vsel %vm455, %v503, 0.0
          %505 = vadd.xlane.f32.xlu0 %v504
          %v506 = vpop.xlane.xlu0 %505
          %v507 = vrot.slane %v506, 4
          %v508 = vadd.f32 %v506, %v507
          %v509 = vrot.slane %v508, 2
          %v510 = vadd.f32 %v508, %v509
          %v511 = vrot.slane %v510, 1
          %v512 = vadd.f32 %v510, %v511
          %s513 = vtos %v512
          %v514 = vstv %s513
          %v515 = vld [vmem:[#allocation5] sm:$0x1]
          %v516 = vsel %vm455, %v515, 0.0
          %517 = vadd.xlane.f32.xlu0 %v516
          %v518 = vpop.xlane.xlu0 %517
          %v519 = vrot.slane %v518, 4
          %v520 = vadd.f32 %v518, %v519
          %v521 = vrot.slane %v520, 2
          %v522 = vadd.f32 %v520, %v521
          %v523 = vrot.slane %v522, 1
          %v524 = vadd.f32 %v522, %v523
          %s525 = vtos %v524
          %v526 = vstv %s525
          %v527 = vld [vmem:[#allocation6] sm:$0x1]
          %v528 = vsel %vm455, %v527, 0.0
          %529 = vadd.xlane.f32.xlu0 %v528
          %v530 = vpop.xlane.xlu0 %529
          %v531 = vrot.slane %v530, 4
          %v532 = vadd.f32 %v530, %v531
          %v533 = vrot.slane %v532, 2
          %v534 = vadd.f32 %v532, %v533
          %v535 = vrot.slane %v534, 1
          %v536 = vadd.f32 %v534, %v535
          %s537 = vtos %v536
          %v538 = vstv %s537
          %v539 = vld [vmem:[#allocation7] sm:$0x1]
          %v540 = vsel %vm455, %v539, 0.0
          %541 = vadd.xlane.f32.xlu0 %v540
          %v542 = vpop.xlane.xlu0 %541
          %v543 = vrot.slane %v542, 4
          %v544 = vadd.f32 %v542, %v543
          %v545 = vrot.slane %v544, 2
          %v546 = vadd.f32 %v544, %v545
          %v547 = vrot.slane %v546, 1
          %v548 = vadd.f32 %v546, %v547
          %s549 = vtos %v548
          %v550 = vstv %s549
          %v551 = vadd.f32 %v514, %v526
          %v552 = vrcp.pop %v551
          %v553 = vmul.f32 %v551, %v552
          %v554 = vsub.f32 1.0, %v553
          %v555 = vmul.f32 %v552, %v554
          %v556 = vadd.f32 %v552, %v555
          %vm557 = vweird.f32 %v551
          %vm558 = vweird.f32 %v552
          %vm559 = vmor %vm557, %vm558
          %v560 = vsel %vm559, %v552, %v556
          %v561 = vand.u32 2147483647, %v551
          %vm562 = vcmp.eq.f32.partialorder %v561, 8.507059e+37
          %v563 = vand.u32 %v551, 2147483648
          %v564 = vor.u32 1.1754944e-38, %v563
          %v565 = vsel %vm562, %v564, %v560
          %v566 = vmul.f32 %v526, %v565
          %v567 = vmul.f32 %v566, %v538
          %v568 = vmul.f32 %v514, %v565
          %v569 = vmul.f32 %v568, %v550
          %v570 = vadd.f32 %v567, %v569
          %v571 = vmul.f32 %v570, 0.001953125
          %vm572 = vcmask 0
          %573 = vst.msk [vmem:[#allocation12] sm:$0x1] %vm572, %v571
        $region78: #{tpu_custom_call.1} parent=27 // pred_fallthru
          _
        // Predicated region
        $region79: #{tpu_custom_call.1} parent=27 // pred_check
          %p574 = pneg %p84
        $region80: #{tpu_custom_call.1} parent=27 // pred_check_branch
          %576 = sbr.rel (%p574) target = $region82
        $region81: #{tpu_custom_call.1} parent=27 // pred_region
          %578 = vsyncadd [#allocation11], 0
          %s580 = sshll.u32 [#allocation12], 4
          %s581 = int_to_ptr.vmem [resolvable:$true] %s580
          %s582 = sshll.u32 %s4, 4
          %s583 = int_to_ptr.hbm [resolvable:$true] %s582
          %585 = dma.vmem_to_hbm [thread:$0]  %s581, 16, %s583, [#allocation11]
        $region82: #{tpu_custom_call.1} parent=27 // pred_fallthru
          _
        // Predicated region
        $region83: #{tpu_custom_call.1} parent=27 // pred_check
          %p586 = pneg %p84
        $region84: #{tpu_custom_call.1} parent=27 // pred_check_branch
          %588 = sbr.rel (%p586) target = $region86
        $region85: #{tpu_custom_call.1} parent=27 // pred_region
          %590 = dma.done [#allocation11], 16
        $region86: #{tpu_custom_call.1} parent=27 // pred_fallthru
          _
      $region28: #{tpu_custom_call.1} parent=5 // pred_fallthru
        _
      %p591 = scmp.le.s32.totalorder 2, %s14
      // Predicated region
      $region87: #{tpu_custom_call.1} parent=5 // pred_check
        %p592 = pneg %p591
      $region88: #{tpu_custom_call.1} parent=5 // pred_check_branch
        %594 = sbr.rel (%p592) target = $region90
      $region89: #{tpu_custom_call.1} parent=5 // pred_region
        %s595 = ssub.s32 %s14, 2
      $region90: #{tpu_custom_call.1} parent=5 // pred_fallthru
        _
    $region6: #{tpu_custom_call.1} parent=1 // loop_footer
      %s18 = sadd.s32 1, %s14
    $region7: #{tpu_custom_call.1} parent=1 // loop_footer_branch
      %13 = sbr.rel target = $region3
    $region8: #{tpu_custom_call.1} parent=1 // loop_exit
      _
    %596 = vsyncpa [#allocation10], 1
    %s597 = scalar_lea.sflag [#allocation10], 1
    %598 = vsyncpa %s597, 1
    %599 = vsyncpa [#allocation11], 1
    %s600 = scalar_lea.sflag [#allocation11], 1
    %601 = vsyncpa %s600, 1
  %602 = vsyncmov [#allocation8]
  %s603 = vpop.sfrf %602
  %p604 = scmp.eq.s32.totalorder %s603, 0
  %p605 = pneg %p604
  %607 = shalt.err (%p605)
  %s608 = scalar_lea.sflag [#allocation8], 1
  %609 = vsyncmov %s608
  %s610 = vpop.sfrf %609
  %p611 = scmp.eq.s32.totalorder %s610, 0
  %p612 = pneg %p611
  %614 = shalt.err (%p612)

</llo_original>
